<compile_context>
chip_gen: v5e
topology: v5e:2x2
jax: 0.10.0
libtpu: 0.0.40
codegen_flags: <defaults>
</compile_context>

<pallas_src>
import functools

import jax
import jax.numpy as jnp
from jax.experimental import pallas as pl
from jax.experimental.pallas import tpu as pltpu


def _area_poly_kernel(xs_ref, ys_ref, coef_ref, tgt_ref, out_ref, *, P):
    """Rasterize bb polygons (batches packed along sublanes) and emit the
    lane-partial sum of (poly - target)^2 for this grid block.

    xs_ref, ys_ref : VMEM f32 (rows, 128)      pixel x / y coords (shared)
    coef_ref       : VMEM f32 (1, rows, 4*P)   per-row [vy | ady | bdx | c]
    tgt_ref        : VMEM f32 (1, rows, 128)   lane-dense target plane
    out_ref        : VMEM f32 (1, 1, 128)      lane-partial sums
    """
    xs = xs_ref[...]                       # (rows, 128)
    ys = ys_ref[...]

    def col(idx):
        # (rows, 1) column; lane-broadcasts against (rows, 128) in the ops.
        return coef_ref[0, :, idx:idx + 1]

    # TODO(synk): PIL ImageDraw.polygon uses a scanline fill plus an
    # `outline=0` boundary pass; approximated here with an even-odd
    # (crossing-number) point-in-polygon rasterization.
    gt_first = col(0) > ys                 # hoisted per-vertex compare
    gt_p = gt_first
    inside = jnp.zeros(gt_first.shape, dtype=jnp.bool_)
    for p in range(P):                     # fully unrolled edge loop
        pn = (p + 1) % P
        gt_pn = gt_first if pn == 0 else (col(pn) > ys)
        ady = col(P + p)                   # |dy|
        bdx = col(2 * P + p)               # sign(dy) * dx
        cc = col(3 * P + p)                # x1*|dy| - y1*sign(dy)*dx
        crosses = gt_p != gt_pn            # horizontal edges -> False
        crossing = jnp.logical_and(crosses, xs * ady - ys * bdx <= cc)
        inside = inside != crossing        # bool parity flip (XOR)
        gt_p = gt_pn

    t = tgt_ref[0]                         # (rows, 128)
    # poly is 255 inside / 0 outside; fuse the select with the subtraction.
    diff = jnp.where(inside, 255.0 - t, -t)
    # Cross-sublane reduce on the (idle) XLU before writeback.
    out_ref[0] = jnp.sum(diff * diff, axis=0, keepdims=True)


def _transpose_and_gather_feat(output, ind):
    # output: (B, C, H, W), ind: (B, K) int32  ->  (B, K, C)
    B, C, H, W = output.shape
    K = ind.shape[1]
    feat = jnp.transpose(output, (0, 2, 3, 1)).reshape(B, H * W, C)
    idx = jnp.broadcast_to(ind[:, :, None].astype(jnp.int32), (B, K, C))
    return jnp.take_along_axis(feat, idx, axis=1)


@jax.jit
def area_poly_loss(output, mask, ind, target, centers):
    B, C, H, W = output.shape
    K = ind.shape[1]
    npairs = C // 2                        # len(range(0, C-1, 2))
    P = K * npairs                         # polygon vertices per batch

    pred = _transpose_and_gather_feat(output, ind)            # (B, K, C)

    # Polygon vertices (same ordering as the PyTorch double loop); int()
    # truncation toward zero == jnp.trunc.
    pxy = pred[:, :, : 2 * npairs].reshape(B, K, npairs, 2)
    vx = jnp.trunc(pxy[..., 0] + centers[..., 0:1]).reshape(B, P).astype(jnp.float32)
    vy = jnp.trunc(pxy[..., 1] + centers[..., 1:2]).reshape(B, P).astype(jnp.float32)

    # Divide-free crossing-test coefficients, precomputed per edge:
    #   xs*|dy| - ys*(s*dx) <= x1*|dy| - y1*(s*dx),  s = sign(dy).
    x2 = jnp.roll(vx, -1, axis=1)
    y2 = jnp.roll(vy, -1, axis=1)
    dy = y2 - vy
    s = jnp.where(dy >= 0.0, 1.0, -1.0)
    ady = s * dy
    bdx = s * (x2 - vx)
    cc = vx * ady - vy * bdx
    coef = jnp.concatenate([vy, ady, bdx, cc], axis=1).astype(jnp.float32)  # (B, 4P)

    # Lane-dense pixel plane: 128 contiguous pixels per sublane row.
    HW = H * W
    n_sub = pl.cdiv(HW, 128)
    HW_pad = n_sub * 128

    # Batch coarsening: bb batches per grid step, but always >= 2 grid blocks
    # when B >= 2 so both v7x TensorCores get work.
    bb = max(1, min(8, pl.cdiv(B, 2)))
    num_blocks = pl.cdiv(B, bb)
    B_pad = num_blocks * bb
    rows = bb * n_sub

    # Targets: batches packed along sublanes -> (num_blocks, bb*n_sub, 128).
    # Zero-padded batches (all-zero coefficients + all-zero target) contribute 0.
    tgt = target.astype(jnp.float32).reshape(B, HW)
    tgt = jnp.pad(tgt, ((0, B_pad - B), (0, HW_pad - HW)))
    tgt = tgt.reshape(num_blocks, rows, 128)

    coef = jnp.pad(coef, ((0, B_pad - B), (0, 0)))
    coef = jnp.repeat(coef, n_sub, axis=0).reshape(num_blocks, rows, 4 * P)

    # Pixel coordinate planes, shared by every block.  Padded pixels get
    # ys = -1e30 so every vertex satisfies vy > ys -> never "inside" -> 0 loss.
    flat = jnp.arange(HW_pad, dtype=jnp.int32)
    xs_seg = (flat % W).astype(jnp.float32)
    ys_seg = jnp.where(flat < HW, (flat // W).astype(jnp.float32), -1e30)
    xs_plane = jnp.tile(xs_seg.reshape(n_sub, 128), (bb, 1))
    ys_plane = jnp.tile(ys_seg.reshape(n_sub, 128), (bb, 1))

    # TODO(synk): for very large H*W, add a second grid axis tiling the pixel
    # rows (~512 sublanes per tile) to bound VMEM (v7x has 64 MiB).
    kernel = functools.partial(_area_poly_kernel, P=P)
    partial_sums = pl.pallas_call(
        kernel,
        grid=(num_blocks,),
        in_specs=[
            pl.BlockSpec((rows, 128), lambda blk: (0, 0)),
            pl.BlockSpec((rows, 128), lambda blk: (0, 0)),
            pl.BlockSpec((1, rows, 4 * P), lambda blk: (blk, 0, 0)),
            pl.BlockSpec((1, rows, 128), lambda blk: (blk, 0, 0)),
        ],
        out_specs=pl.BlockSpec((1, 1, 128), lambda blk: (blk, 0, 0)),
        out_shape=jax.ShapeDtypeStruct((num_blocks, 1, 128), jnp.float32),
        compiler_params=pltpu.CompilerParams(
            dimension_semantics=("parallel",)),
    )(xs_plane, ys_plane, coef, tgt)

    # Every batch's MSE is a mean over H*W, so the batch-sum of MSEs equals the
    # total sum of squared diffs divided by H*W.
    mse_sum = jnp.sum(partial_sums) / float(HW)

    # mask.unsqueeze(2).expand_as(pred).float().sum() == mask.sum() * C
    mask_expanded = jnp.broadcast_to(
        mask[:, :, None].astype(jnp.float32), (B, K, C))
    loss = mse_sum / (jnp.sum(mask_expanded) + 0.0001)
    return loss


if __name__ == "__main__":
    B, C, H, W, K = 2, 4, 16, 16, 8

    key = jax.random.PRNGKey(0)
    k1, k2, k3, k4, k5 = jax.random.split(key, 5)

    output = jax.random.normal(k1, (B, C, H, W), dtype=jnp.float32) * 3.0
    ind = jax.random.randint(k2, (B, K), 0, H * W, dtype=jnp.int32)
    mask = (jax.random.uniform(k3, (B, K)) > 0.3).astype(jnp.float32)
    target = (jax.random.uniform(k4, (B, H, W)) > 0.5).astype(jnp.float32) * 255.0
    centers = jax.random.uniform(
        k5, (B, K, 2), minval=2.0, maxval=float(H - 3)).astype(jnp.float32)

    loss = area_poly_loss(output, mask, ind, target, centers)
    jax.block_until_ready(loss)
    print("KERNEL_OK")
</pallas_src>

<mosaic_0001>
module attributes {stable_mosaic.version = 11 : i64} {
  func.func @_area_poly_kernel(%arg0: i32, %arg1: memref<2x128xf32, #tpu.memory_space<vmem>>, %arg2: memref<2x128xf32, #tpu.memory_space<vmem>>, %arg3: memref<1x2x64xf32, #tpu.memory_space<vmem>>, %arg4: memref<1x2x128xf32, #tpu.memory_space<vmem>>, %arg5: memref<1x1x128xf32, #tpu.memory_space<vmem>>) attributes {dimension_semantics = [#tpu.dimension_semantics<parallel>], iteration_bounds = array<i64: 2>, scalar_prefetch = 0 : i64, scratch_operands = 0 : i64, tpu.core_type = #tpu.core_type<tc>, window_params = [{pipeline_mode = #tpu.pipeline_mode<synchronous>, transform_indices = @transform_0, window_bounds = array<i64: 2, 128>}, {pipeline_mode = #tpu.pipeline_mode<synchronous>, transform_indices = @transform_1, window_bounds = array<i64: 2, 128>}, {transform_indices = @transform_2, window_bounds = array<i64: 1, 2, 64>}, {transform_indices = @transform_3, window_bounds = array<i64: 1, 2, 128>}, {transform_indices = @transform_4, window_bounds = array<i64: 1, 1, 128>}]} {
    %c0 = arith.constant 0 : index
    %c0_0 = arith.constant 0 : index
    %0 = vector.load %arg1[%c0, %c0_0] : memref<2x128xf32, #tpu.memory_space<vmem>>, vector<2x128xf32>
    %c0_1 = arith.constant 0 : index
    %c0_2 = arith.constant 0 : index
    %1 = vector.load %arg2[%c0_1, %c0_2] : memref<2x128xf32, #tpu.memory_space<vmem>>, vector<2x128xf32>
    %c0_3 = arith.constant 0 : index
    %c0_4 = arith.constant 0 : index
    %c0_5 = arith.constant 0 : index
    %2 = vector.load %arg3[%c0_3, %c0_4, %c0_5] : memref<1x2x64xf32, #tpu.memory_space<vmem>>, vector<1x2x1xf32>
    %3 = vector.shape_cast %2 : vector<1x2x1xf32> to vector<2x1xf32>
    %4 = vector.broadcast %3 : vector<2x1xf32> to vector<2x128xf32>
    %5 = arith.cmpf ogt, %4, %1 : vector<2x128xf32>
    %false = arith.constant false
    %6 = vector.broadcast %false : i1 to vector<2x128xi1>
    %c0_6 = arith.constant 0 : index
    %c0_7 = arith.constant 0 : index
    %c1 = arith.constant 1 : index
    %7 = vector.load %arg3[%c0_6, %c0_7, %c1] : memref<1x2x64xf32, #tpu.memory_space<vmem>>, vector<1x2x1xf32>
    %8 = vector.shape_cast %7 : vector<1x2x1xf32> to vector<2x1xf32>
    %9 = vector.broadcast %8 : vector<2x1xf32> to vector<2x128xf32>
    %10 = arith.cmpf ogt, %9, %1 : vector<2x128xf32>
    %c0_8 = arith.constant 0 : index
    %c0_9 = arith.constant 0 : index
    %c16 = arith.constant 16 : index
    %11 = vector.load %arg3[%c0_8, %c0_9, %c16] : memref<1x2x64xf32, #tpu.memory_space<vmem>>, vector<1x2x1xf32>
    %12 = vector.shape_cast %11 : vector<1x2x1xf32> to vector<2x1xf32>
    %c0_10 = arith.constant 0 : index
    %c0_11 = arith.constant 0 : index
    %c32 = arith.constant 32 : index
    %13 = vector.load %arg3[%c0_10, %c0_11, %c32] : memref<1x2x64xf32, #tpu.memory_space<vmem>>, vector<1x2x1xf32>
    %14 = vector.shape_cast %13 : vector<1x2x1xf32> to vector<2x1xf32>
    %c0_12 = arith.constant 0 : index
    %c0_13 = arith.constant 0 : index
    %c48 = arith.constant 48 : index
    %15 = vector.load %arg3[%c0_12, %c0_13, %c48] : memref<1x2x64xf32, #tpu.memory_space<vmem>>, vector<1x2x1xf32>
    %16 = vector.shape_cast %15 : vector<1x2x1xf32> to vector<2x1xf32>
    %17 = arith.xori %5, %10 : vector<2x128xi1>
    %18 = vector.broadcast %12 : vector<2x1xf32> to vector<2x128xf32>
    %19 = arith.mulf %0, %18 : vector<2x128xf32>
    %20 = vector.broadcast %14 : vector<2x1xf32> to vector<2x128xf32>
    %21 = arith.mulf %1, %20 : vector<2x128xf32>
    %22 = arith.subf %19, %21 : vector<2x128xf32>
    %23 = vector.broadcast %16 : vector<2x1xf32> to vector<2x128xf32>
    %24 = arith.cmpf ole, %22, %23 : vector<2x128xf32>
    %25 = arith.andi %17, %24 : vector<2x128xi1>
    %26 = arith.xori %6, %25 : vector<2x128xi1>
    %c0_14 = arith.constant 0 : index
    %c0_15 = arith.constant 0 : index
    %c2 = arith.constant 2 : index
    %27 = vector.load %arg3[%c0_14, %c0_15, %c2] : memref<1x2x64xf32, #tpu.memory_space<vmem>>, vector<1x2x1xf32>
    %28 = vector.shape_cast %27 : vector<1x2x1xf32> to vector<2x1xf32>
    %29 = vector.broadcast %28 : vector<2x1xf32> to vector<2x128xf32>
    %30 = arith.cmpf ogt, %29, %1 : vector<2x128xf32>
    %c0_16 = arith.constant 0 : index
    %c0_17 = arith.constant 0 : index
    %c17 = arith.constant 17 : index
    %31 = vector.load %arg3[%c0_16, %c0_17, %c17] : memref<1x2x64xf32, #tpu.memory_space<vmem>>, vector<1x2x1xf32>
    %32 = vector.shape_cast %31 : vector<1x2x1xf32> to vector<2x1xf32>
    %c0_18 = arith.constant 0 : index
    %c0_19 = arith.constant 0 : index
    %c33 = arith.constant 33 : index
    %33 = vector.load %arg3[%c0_18, %c0_19, %c33] : memref<1x2x64xf32, #tpu.memory_space<vmem>>, vector<1x2x1xf32>
    %34 = vector.shape_cast %33 : vector<1x2x1xf32> to vector<2x1xf32>
    %c0_20 = arith.constant 0 : index
    %c0_21 = arith.constant 0 : index
    %c49 = arith.constant 49 : index
    %35 = vector.load %arg3[%c0_20, %c0_21, %c49] : memref<1x2x64xf32, #tpu.memory_space<vmem>>, vector<1x2x1xf32>
    %36 = vector.shape_cast %35 : vector<1x2x1xf32> to vector<2x1xf32>
    %37 = arith.xori %10, %30 : vector<2x128xi1>
    %38 = vector.broadcast %32 : vector<2x1xf32> to vector<2x128xf32>
    %39 = arith.mulf %0, %38 : vector<2x128xf32>
    %40 = vector.broadcast %34 : vector<2x1xf32> to vector<2x128xf32>
    %41 = arith.mulf %1, %40 : vector<2x128xf32>
    %42 = arith.subf %39, %41 : vector<2x128xf32>
    %43 = vector.broadcast %36 : vector<2x1xf32> to vector<2x128xf32>
    %44 = arith.cmpf ole, %42, %43 : vector<2x128xf32>
    %45 = arith.andi %37, %44 : vector<2x128xi1>
    %46 = arith.xori %26, %45 : vector<2x128xi1>
    %c0_22 = arith.constant 0 : index
    %c0_23 = arith.constant 0 : index
    %c3 = arith.constant 3 : index
    %47 = vector.load %arg3[%c0_22, %c0_23, %c3] : memref<1x2x64xf32, #tpu.memory_space<vmem>>, vector<1x2x1xf32>
    %48 = vector.shape_cast %47 : vector<1x2x1xf32> to vector<2x1xf32>
    %49 = vector.broadcast %48 : vector<2x1xf32> to vector<2x128xf32>
    %50 = arith.cmpf ogt, %49, %1 : vector<2x128xf32>
    %c0_24 = arith.constant 0 : index
    %c0_25 = arith.constant 0 : index
    %c18 = arith.constant 18 : index
    %51 = vector.load %arg3[%c0_24, %c0_25, %c18] : memref<1x2x64xf32, #tpu.memory_space<vmem>>, vector<1x2x1xf32>
    %52 = vector.shape_cast %51 : vector<1x2x1xf32> to vector<2x1xf32>
    %c0_26 = arith.constant 0 : index
    %c0_27 = arith.constant 0 : index
    %c34 = arith.constant 34 : index
    %53 = vector.load %arg3[%c0_26, %c0_27, %c34] : memref<1x2x64xf32, #tpu.memory_space<vmem>>, vector<1x2x1xf32>
    %54 = vector.shape_cast %53 : vector<1x2x1xf32> to vector<2x1xf32>
    %c0_28 = arith.constant 0 : index
    %c0_29 = arith.constant 0 : index
    %c50 = arith.constant 50 : index
    %55 = vector.load %arg3[%c0_28, %c0_29, %c50] : memref<1x2x64xf32, #tpu.memory_space<vmem>>, vector<1x2x1xf32>
    %56 = vector.shape_cast %55 : vector<1x2x1xf32> to vector<2x1xf32>
    %57 = arith.xori %30, %50 : vector<2x128xi1>
    %58 = vector.broadcast %52 : vector<2x1xf32> to vector<2x128xf32>
    %59 = arith.mulf %0, %58 : vector<2x128xf32>
    %60 = vector.broadcast %54 : vector<2x1xf32> to vector<2x128xf32>
    %61 = arith.mulf %1, %60 : vector<2x128xf32>
    %62 = arith.subf %59, %61 : vector<2x128xf32>
    %63 = vector.broadcast %56 : vector<2x1xf32> to vector<2x128xf32>
    %64 = arith.cmpf ole, %62, %63 : vector<2x128xf32>
    %65 = arith.andi %57, %64 : vector<2x128xi1>
    %66 = arith.xori %46, %65 : vector<2x128xi1>
    %c0_30 = arith.constant 0 : index
    %c0_31 = arith.constant 0 : index
    %c4 = arith.constant 4 : index
    %67 = vector.load %arg3[%c0_30, %c0_31, %c4] : memref<1x2x64xf32, #tpu.memory_space<vmem>>, vector<1x2x1xf32>
    %68 = vector.shape_cast %67 : vector<1x2x1xf32> to vector<2x1xf32>
    %69 = vector.broadcast %68 : vector<2x1xf32> to vector<2x128xf32>
    %70 = arith.cmpf ogt, %69, %1 : vector<2x128xf32>
    %c0_32 = arith.constant 0 : index
    %c0_33 = arith.constant 0 : index
    %c19 = arith.constant 19 : index
    %71 = vector.load %arg3[%c0_32, %c0_33, %c19] : memref<1x2x64xf32, #tpu.memory_space<vmem>>, vector<1x2x1xf32>
    %72 = vector.shape_cast %71 : vector<1x2x1xf32> to vector<2x1xf32>
    %c0_34 = arith.constant 0 : index
    %c0_35 = arith.constant 0 : index
    %c35 = arith.constant 35 : index
    %73 = vector.load %arg3[%c0_34, %c0_35, %c35] : memref<1x2x64xf32, #tpu.memory_space<vmem>>, vector<1x2x1xf32>
    %74 = vector.shape_cast %73 : vector<1x2x1xf32> to vector<2x1xf32>
    %c0_36 = arith.constant 0 : index
    %c0_37 = arith.constant 0 : index
    %c51 = arith.constant 51 : index
    %75 = vector.load %arg3[%c0_36, %c0_37, %c51] : memref<1x2x64xf32, #tpu.memory_space<vmem>>, vector<1x2x1xf32>
    %76 = vector.shape_cast %75 : vector<1x2x1xf32> to vector<2x1xf32>
    %77 = arith.xori %50, %70 : vector<2x128xi1>
    %78 = vector.broadcast %72 : vector<2x1xf32> to vector<2x128xf32>
    %79 = arith.mulf %0, %78 : vector<2x128xf32>
    %80 = vector.broadcast %74 : vector<2x1xf32> to vector<2x128xf32>
    %81 = arith.mulf %1, %80 : vector<2x128xf32>
    %82 = arith.subf %79, %81 : vector<2x128xf32>
    %83 = vector.broadcast %76 : vector<2x1xf32> to vector<2x128xf32>
    %84 = arith.cmpf ole, %82, %83 : vector<2x128xf32>
    %85 = arith.andi %77, %84 : vector<2x128xi1>
    %86 = arith.xori %66, %85 : vector<2x128xi1>
    %c0_38 = arith.constant 0 : index
    %c0_39 = arith.constant 0 : index
    %c5 = arith.constant 5 : index
    %87 = vector.load %arg3[%c0_38, %c0_39, %c5] : memref<1x2x64xf32, #tpu.memory_space<vmem>>, vector<1x2x1xf32>
    %88 = vector.shape_cast %87 : vector<1x2x1xf32> to vector<2x1xf32>
    %89 = vector.broadcast %88 : vector<2x1xf32> to vector<2x128xf32>
    %90 = arith.cmpf ogt, %89, %1 : vector<2x128xf32>
    %c0_40 = arith.constant 0 : index
    %c0_41 = arith.constant 0 : index
    %c20 = arith.constant 20 : index
    %91 = vector.load %arg3[%c0_40, %c0_41, %c20] : memref<1x2x64xf32, #tpu.memory_space<vmem>>, vector<1x2x1xf32>
    %92 = vector.shape_cast %91 : vector<1x2x1xf32> to vector<2x1xf32>
    %c0_42 = arith.constant 0 : index
    %c0_43 = arith.constant 0 : index
    %c36 = arith.constant 36 : index
    %93 = vector.load %arg3[%c0_42, %c0_43, %c36] : memref<1x2x64xf32, #tpu.memory_space<vmem>>, vector<1x2x1xf32>
    %94 = vector.shape_cast %93 : vector<1x2x1xf32> to vector<2x1xf32>
    %c0_44 = arith.constant 0 : index
    %c0_45 = arith.constant 0 : index
    %c52 = arith.constant 52 : index
    %95 = vector.load %arg3[%c0_44, %c0_45, %c52] : memref<1x2x64xf32, #tpu.memory_space<vmem>>, vector<1x2x1xf32>
    %96 = vector.shape_cast %95 : vector<1x2x1xf32> to vector<2x1xf32>
    %97 = arith.xori %70, %90 : vector<2x128xi1>
    %98 = vector.broadcast %92 : vector<2x1xf32> to vector<2x128xf32>
    %99 = arith.mulf %0, %98 : vector<2x128xf32>
    %100 = vector.broadcast %94 : vector<2x1xf32> to vector<2x128xf32>
    %101 = arith.mulf %1, %100 : vector<2x128xf32>
    %102 = arith.subf %99, %101 : vector<2x128xf32>
    %103 = vector.broadcast %96 : vector<2x1xf32> to vector<2x128xf32>
    %104 = arith.cmpf ole, %102, %103 : vector<2x128xf32>
    %105 = arith.andi %97, %104 : vector<2x128xi1>
    %106 = arith.xori %86, %105 : vector<2x128xi1>
    %c0_46 = arith.constant 0 : index
    %c0_47 = arith.constant 0 : index
    %c6 = arith.constant 6 : index
    %107 = vector.load %arg3[%c0_46, %c0_47, %c6] : memref<1x2x64xf32, #tpu.memory_space<vmem>>, vector<1x2x1xf32>
    %108 = vector.shape_cast %107 : vector<1x2x1xf32> to vector<2x1xf32>
    %109 = vector.broadcast %108 : vector<2x1xf32> to vector<2x128xf32>
    %110 = arith.cmpf ogt, %109, %1 : vector<2x128xf32>
    %c0_48 = arith.constant 0 : index
    %c0_49 = arith.constant 0 : index
    %c21 = arith.constant 21 : index
    %111 = vector.load %arg3[%c0_48, %c0_49, %c21] : memref<1x2x64xf32, #tpu.memory_space<vmem>>, vector<1x2x1xf32>
    %112 = vector.shape_cast %111 : vector<1x2x1xf32> to vector<2x1xf32>
    %c0_50 = arith.constant 0 : index
    %c0_51 = arith.constant 0 : index
    %c37 = arith.constant 37 : index
    %113 = vector.load %arg3[%c0_50, %c0_51, %c37] : memref<1x2x64xf32, #tpu.memory_space<vmem>>, vector<1x2x1xf32>
    %114 = vector.shape_cast %113 : vector<1x2x1xf32> to vector<2x1xf32>
    %c0_52 = arith.constant 0 : index
    %c0_53 = arith.constant 0 : index
    %c53 = arith.constant 53 : index
    %115 = vector.load %arg3[%c0_52, %c0_53, %c53] : memref<1x2x64xf32, #tpu.memory_space<vmem>>, vector<1x2x1xf32>
    %116 = vector.shape_cast %115 : vector<1x2x1xf32> to vector<2x1xf32>
    %117 = arith.xori %90, %110 : vector<2x128xi1>
    %118 = vector.broadcast %112 : vector<2x1xf32> to vector<2x128xf32>
    %119 = arith.mulf %0, %118 : vector<2x128xf32>
    %120 = vector.broadcast %114 : vector<2x1xf32> to vector<2x128xf32>
    %121 = arith.mulf %1, %120 : vector<2x128xf32>
    %122 = arith.subf %119, %121 : vector<2x128xf32>
    %123 = vector.broadcast %116 : vector<2x1xf32> to vector<2x128xf32>
    %124 = arith.cmpf ole, %122, %123 : vector<2x128xf32>
    %125 = arith.andi %117, %124 : vector<2x128xi1>
    %126 = arith.xori %106, %125 : vector<2x128xi1>
    %c0_54 = arith.constant 0 : index
    %c0_55 = arith.constant 0 : index
    %c7 = arith.constant 7 : index
    %127 = vector.load %arg3[%c0_54, %c0_55, %c7] : memref<1x2x64xf32, #tpu.memory_space<vmem>>, vector<1x2x1xf32>
    %128 = vector.shape_cast %127 : vector<1x2x1xf32> to vector<2x1xf32>
    %129 = vector.broadcast %128 : vector<2x1xf32> to vector<2x128xf32>
    %130 = arith.cmpf ogt, %129, %1 : vector<2x128xf32>
    %c0_56 = arith.constant 0 : index
    %c0_57 = arith.constant 0 : index
    %c22 = arith.constant 22 : index
    %131 = vector.load %arg3[%c0_56, %c0_57, %c22] : memref<1x2x64xf32, #tpu.memory_space<vmem>>, vector<1x2x1xf32>
    %132 = vector.shape_cast %131 : vector<1x2x1xf32> to vector<2x1xf32>
    %c0_58 = arith.constant 0 : index
    %c0_59 = arith.constant 0 : index
    %c38 = arith.constant 38 : index
    %133 = vector.load %arg3[%c0_58, %c0_59, %c38] : memref<1x2x64xf32, #tpu.memory_space<vmem>>, vector<1x2x1xf32>
    %134 = vector.shape_cast %133 : vector<1x2x1xf32> to vector<2x1xf32>
    %c0_60 = arith.constant 0 : index
    %c0_61 = arith.constant 0 : index
    %c54 = arith.constant 54 : index
    %135 = vector.load %arg3[%c0_60, %c0_61, %c54] : memref<1x2x64xf32, #tpu.memory_space<vmem>>, vector<1x2x1xf32>
    %136 = vector.shape_cast %135 : vector<1x2x1xf32> to vector<2x1xf32>
    %137 = arith.xori %110, %130 : vector<2x128xi1>
    %138 = vector.broadcast %132 : vector<2x1xf32> to vector<2x128xf32>
    %139 = arith.mulf %0, %138 : vector<2x128xf32>
    %140 = vector.broadcast %134 : vector<2x1xf32> to vector<2x128xf32>
    %141 = arith.mulf %1, %140 : vector<2x128xf32>
    %142 = arith.subf %139, %141 : vector<2x128xf32>
    %143 = vector.broadcast %136 : vector<2x1xf32> to vector<2x128xf32>
    %144 = arith.cmpf ole, %142, %143 : vector<2x128xf32>
    %145 = arith.andi %137, %144 : vector<2x128xi1>
    %146 = arith.xori %126, %145 : vector<2x128xi1>
    %c0_62 = arith.constant 0 : index
    %c0_63 = arith.constant 0 : index
    %c8 = arith.constant 8 : index
    %147 = vector.load %arg3[%c0_62, %c0_63, %c8] : memref<1x2x64xf32, #tpu.memory_space<vmem>>, vector<1x2x1xf32>
    %148 = vector.shape_cast %147 : vector<1x2x1xf32> to vector<2x1xf32>
    %149 = vector.broadcast %148 : vector<2x1xf32> to vector<2x128xf32>
    %150 = arith.cmpf ogt, %149, %1 : vector<2x128xf32>
    %c0_64 = arith.constant 0 : index
    %c0_65 = arith.constant 0 : index
    %c23 = arith.constant 23 : index
    %151 = vector.load %arg3[%c0_64, %c0_65, %c23] : memref<1x2x64xf32, #tpu.memory_space<vmem>>, vector<1x2x1xf32>
    %152 = vector.shape_cast %151 : vector<1x2x1xf32> to vector<2x1xf32>
    %c0_66 = arith.constant 0 : index
    %c0_67 = arith.constant 0 : index
    %c39 = arith.constant 39 : index
    %153 = vector.load %arg3[%c0_66, %c0_67, %c39] : memref<1x2x64xf32, #tpu.memory_space<vmem>>, vector<1x2x1xf32>
    %154 = vector.shape_cast %153 : vector<1x2x1xf32> to vector<2x1xf32>
    %c0_68 = arith.constant 0 : index
    %c0_69 = arith.constant 0 : index
    %c55 = arith.constant 55 : index
    %155 = vector.load %arg3[%c0_68, %c0_69, %c55] : memref<1x2x64xf32, #tpu.memory_space<vmem>>, vector<1x2x1xf32>
    %156 = vector.shape_cast %155 : vector<1x2x1xf32> to vector<2x1xf32>
    %157 = arith.xori %130, %150 : vector<2x128xi1>
    %158 = vector.broadcast %152 : vector<2x1xf32> to vector<2x128xf32>
    %159 = arith.mulf %0, %158 : vector<2x128xf32>
    %160 = vector.broadcast %154 : vector<2x1xf32> to vector<2x128xf32>
    %161 = arith.mulf %1, %160 : vector<2x128xf32>
    %162 = arith.subf %159, %161 : vector<2x128xf32>
    %163 = vector.broadcast %156 : vector<2x1xf32> to vector<2x128xf32>
    %164 = arith.cmpf ole, %162, %163 : vector<2x128xf32>
    %165 = arith.andi %157, %164 : vector<2x128xi1>
    %166 = arith.xori %146, %165 : vector<2x128xi1>
    %c0_70 = arith.constant 0 : index
    %c0_71 = arith.constant 0 : index
    %c9 = arith.constant 9 : index
    %167 = vector.load %arg3[%c0_70, %c0_71, %c9] : memref<1x2x64xf32, #tpu.memory_space<vmem>>, vector<1x2x1xf32>
    %168 = vector.shape_cast %167 : vector<1x2x1xf32> to vector<2x1xf32>
    %169 = vector.broadcast %168 : vector<2x1xf32> to vector<2x128xf32>
    %170 = arith.cmpf ogt, %169, %1 : vector<2x128xf32>
    %c0_72 = arith.constant 0 : index
    %c0_73 = arith.constant 0 : index
    %c24 = arith.constant 24 : index
    %171 = vector.load %arg3[%c0_72, %c0_73, %c24] : memref<1x2x64xf32, #tpu.memory_space<vmem>>, vector<1x2x1xf32>
    %172 = vector.shape_cast %171 : vector<1x2x1xf32> to vector<2x1xf32>
    %c0_74 = arith.constant 0 : index
    %c0_75 = arith.constant 0 : index
    %c40 = arith.constant 40 : index
    %173 = vector.load %arg3[%c0_74, %c0_75, %c40] : memref<1x2x64xf32, #tpu.memory_space<vmem>>, vector<1x2x1xf32>
    %174 = vector.shape_cast %173 : vector<1x2x1xf32> to vector<2x1xf32>
    %c0_76 = arith.constant 0 : index
    %c0_77 = arith.constant 0 : index
    %c56 = arith.constant 56 : index
    %175 = vector.load %arg3[%c0_76, %c0_77, %c56] : memref<1x2x64xf32, #tpu.memory_space<vmem>>, vector<1x2x1xf32>
    %176 = vector.shape_cast %175 : vector<1x2x1xf32> to vector<2x1xf32>
    %177 = arith.xori %150, %170 : vector<2x128xi1>
    %178 = vector.broadcast %172 : vector<2x1xf32> to vector<2x128xf32>
    %179 = arith.mulf %0, %178 : vector<2x128xf32>
    %180 = vector.broadcast %174 : vector<2x1xf32> to vector<2x128xf32>
    %181 = arith.mulf %1, %180 : vector<2x128xf32>
    %182 = arith.subf %179, %181 : vector<2x128xf32>
    %183 = vector.broadcast %176 : vector<2x1xf32> to vector<2x128xf32>
    %184 = arith.cmpf ole, %182, %183 : vector<2x128xf32>
    %185 = arith.andi %177, %184 : vector<2x128xi1>
    %186 = arith.xori %166, %185 : vector<2x128xi1>
    %c0_78 = arith.constant 0 : index
    %c0_79 = arith.constant 0 : index
    %c10 = arith.constant 10 : index
    %187 = vector.load %arg3[%c0_78, %c0_79, %c10] : memref<1x2x64xf32, #tpu.memory_space<vmem>>, vector<1x2x1xf32>
    %188 = vector.shape_cast %187 : vector<1x2x1xf32> to vector<2x1xf32>
    %189 = vector.broadcast %188 : vector<2x1xf32> to vector<2x128xf32>
    %190 = arith.cmpf ogt, %189, %1 : vector<2x128xf32>
    %c0_80 = arith.constant 0 : index
    %c0_81 = arith.constant 0 : index
    %c25 = arith.constant 25 : index
    %191 = vector.load %arg3[%c0_80, %c0_81, %c25] : memref<1x2x64xf32, #tpu.memory_space<vmem>>, vector<1x2x1xf32>
    %192 = vector.shape_cast %191 : vector<1x2x1xf32> to vector<2x1xf32>
    %c0_82 = arith.constant 0 : index
    %c0_83 = arith.constant 0 : index
    %c41 = arith.constant 41 : index
    %193 = vector.load %arg3[%c0_82, %c0_83, %c41] : memref<1x2x64xf32, #tpu.memory_space<vmem>>, vector<1x2x1xf32>
    %194 = vector.shape_cast %193 : vector<1x2x1xf32> to vector<2x1xf32>
    %c0_84 = arith.constant 0 : index
    %c0_85 = arith.constant 0 : index
    %c57 = arith.constant 57 : index
    %195 = vector.load %arg3[%c0_84, %c0_85, %c57] : memref<1x2x64xf32, #tpu.memory_space<vmem>>, vector<1x2x1xf32>
    %196 = vector.shape_cast %195 : vector<1x2x1xf32> to vector<2x1xf32>
    %197 = arith.xori %170, %190 : vector<2x128xi1>
    %198 = vector.broadcast %192 : vector<2x1xf32> to vector<2x128xf32>
    %199 = arith.mulf %0, %198 : vector<2x128xf32>
    %200 = vector.broadcast %194 : vector<2x1xf32> to vector<2x128xf32>
    %201 = arith.mulf %1, %200 : vector<2x128xf32>
    %202 = arith.subf %199, %201 : vector<2x128xf32>
    %203 = vector.broadcast %196 : vector<2x1xf32> to vector<2x128xf32>
    %204 = arith.cmpf ole, %202, %203 : vector<2x128xf32>
    %205 = arith.andi %197, %204 : vector<2x128xi1>
    %206 = arith.xori %186, %205 : vector<2x128xi1>
    %c0_86 = arith.constant 0 : index
    %c0_87 = arith.constant 0 : index
    %c11 = arith.constant 11 : index
    %207 = vector.load %arg3[%c0_86, %c0_87, %c11] : memref<1x2x64xf32, #tpu.memory_space<vmem>>, vector<1x2x1xf32>
    %208 = vector.shape_cast %207 : vector<1x2x1xf32> to vector<2x1xf32>
    %209 = vector.broadcast %208 : vector<2x1xf32> to vector<2x128xf32>
    %210 = arith.cmpf ogt, %209, %1 : vector<2x128xf32>
    %c0_88 = arith.constant 0 : index
    %c0_89 = arith.constant 0 : index
    %c26 = arith.constant 26 : index
    %211 = vector.load %arg3[%c0_88, %c0_89, %c26] : memref<1x2x64xf32, #tpu.memory_space<vmem>>, vector<1x2x1xf32>
    %212 = vector.shape_cast %211 : vector<1x2x1xf32> to vector<2x1xf32>
    %c0_90 = arith.constant 0 : index
    %c0_91 = arith.constant 0 : index
    %c42 = arith.constant 42 : index
    %213 = vector.load %arg3[%c0_90, %c0_91, %c42] : memref<1x2x64xf32, #tpu.memory_space<vmem>>, vector<1x2x1xf32>
    %214 = vector.shape_cast %213 : vector<1x2x1xf32> to vector<2x1xf32>
    %c0_92 = arith.constant 0 : index
    %c0_93 = arith.constant 0 : index
    %c58 = arith.constant 58 : index
    %215 = vector.load %arg3[%c0_92, %c0_93, %c58] : memref<1x2x64xf32, #tpu.memory_space<vmem>>, vector<1x2x1xf32>
    %216 = vector.shape_cast %215 : vector<1x2x1xf32> to vector<2x1xf32>
    %217 = arith.xori %190, %210 : vector<2x128xi1>
    %218 = vector.broadcast %212 : vector<2x1xf32> to vector<2x128xf32>
    %219 = arith.mulf %0, %218 : vector<2x128xf32>
    %220 = vector.broadcast %214 : vector<2x1xf32> to vector<2x128xf32>
    %221 = arith.mulf %1, %220 : vector<2x128xf32>
    %222 = arith.subf %219, %221 : vector<2x128xf32>
    %223 = vector.broadcast %216 : vector<2x1xf32> to vector<2x128xf32>
    %224 = arith.cmpf ole, %222, %223 : vector<2x128xf32>
    %225 = arith.andi %217, %224 : vector<2x128xi1>
    %226 = arith.xori %206, %225 : vector<2x128xi1>
    %c0_94 = arith.constant 0 : index
    %c0_95 = arith.constant 0 : index
    %c12 = arith.constant 12 : index
    %227 = vector.load %arg3[%c0_94, %c0_95, %c12] : memref<1x2x64xf32, #tpu.memory_space<vmem>>, vector<1x2x1xf32>
    %228 = vector.shape_cast %227 : vector<1x2x1xf32> to vector<2x1xf32>
    %229 = vector.broadcast %228 : vector<2x1xf32> to vector<2x128xf32>
    %230 = arith.cmpf ogt, %229, %1 : vector<2x128xf32>
    %c0_96 = arith.constant 0 : index
    %c0_97 = arith.constant 0 : index
    %c27 = arith.constant 27 : index
    %231 = vector.load %arg3[%c0_96, %c0_97, %c27] : memref<1x2x64xf32, #tpu.memory_space<vmem>>, vector<1x2x1xf32>
    %232 = vector.shape_cast %231 : vector<1x2x1xf32> to vector<2x1xf32>
    %c0_98 = arith.constant 0 : index
    %c0_99 = arith.constant 0 : index
    %c43 = arith.constant 43 : index
    %233 = vector.load %arg3[%c0_98, %c0_99, %c43] : memref<1x2x64xf32, #tpu.memory_space<vmem>>, vector<1x2x1xf32>
    %234 = vector.shape_cast %233 : vector<1x2x1xf32> to vector<2x1xf32>
    %c0_100 = arith.constant 0 : index
    %c0_101 = arith.constant 0 : index
    %c59 = arith.constant 59 : index
    %235 = vector.load %arg3[%c0_100, %c0_101, %c59] : memref<1x2x64xf32, #tpu.memory_space<vmem>>, vector<1x2x1xf32>
    %236 = vector.shape_cast %235 : vector<1x2x1xf32> to vector<2x1xf32>
    %237 = arith.xori %210, %230 : vector<2x128xi1>
    %238 = vector.broadcast %232 : vector<2x1xf32> to vector<2x128xf32>
    %239 = arith.mulf %0, %238 : vector<2x128xf32>
    %240 = vector.broadcast %234 : vector<2x1xf32> to vector<2x128xf32>
    %241 = arith.mulf %1, %240 : vector<2x128xf32>
    %242 = arith.subf %239, %241 : vector<2x128xf32>
    %243 = vector.broadcast %236 : vector<2x1xf32> to vector<2x128xf32>
    %244 = arith.cmpf ole, %242, %243 : vector<2x128xf32>
    %245 = arith.andi %237, %244 : vector<2x128xi1>
    %246 = arith.xori %226, %245 : vector<2x128xi1>
    %c0_102 = arith.constant 0 : index
    %c0_103 = arith.constant 0 : index
    %c13 = arith.constant 13 : index
    %247 = vector.load %arg3[%c0_102, %c0_103, %c13] : memref<1x2x64xf32, #tpu.memory_space<vmem>>, vector<1x2x1xf32>
    %248 = vector.shape_cast %247 : vector<1x2x1xf32> to vector<2x1xf32>
    %249 = vector.broadcast %248 : vector<2x1xf32> to vector<2x128xf32>
    %250 = arith.cmpf ogt, %249, %1 : vector<2x128xf32>
    %c0_104 = arith.constant 0 : index
    %c0_105 = arith.constant 0 : index
    %c28 = arith.constant 28 : index
    %251 = vector.load %arg3[%c0_104, %c0_105, %c28] : memref<1x2x64xf32, #tpu.memory_space<vmem>>, vector<1x2x1xf32>
    %252 = vector.shape_cast %251 : vector<1x2x1xf32> to vector<2x1xf32>
    %c0_106 = arith.constant 0 : index
    %c0_107 = arith.constant 0 : index
    %c44 = arith.constant 44 : index
    %253 = vector.load %arg3[%c0_106, %c0_107, %c44] : memref<1x2x64xf32, #tpu.memory_space<vmem>>, vector<1x2x1xf32>
    %254 = vector.shape_cast %253 : vector<1x2x1xf32> to vector<2x1xf32>
    %c0_108 = arith.constant 0 : index
    %c0_109 = arith.constant 0 : index
    %c60 = arith.constant 60 : index
    %255 = vector.load %arg3[%c0_108, %c0_109, %c60] : memref<1x2x64xf32, #tpu.memory_space<vmem>>, vector<1x2x1xf32>
    %256 = vector.shape_cast %255 : vector<1x2x1xf32> to vector<2x1xf32>
    %257 = arith.xori %230, %250 : vector<2x128xi1>
    %258 = vector.broadcast %252 : vector<2x1xf32> to vector<2x128xf32>
    %259 = arith.mulf %0, %258 : vector<2x128xf32>
    %260 = vector.broadcast %254 : vector<2x1xf32> to vector<2x128xf32>
    %261 = arith.mulf %1, %260 : vector<2x128xf32>
    %262 = arith.subf %259, %261 : vector<2x128xf32>
    %263 = vector.broadcast %256 : vector<2x1xf32> to vector<2x128xf32>
    %264 = arith.cmpf ole, %262, %263 : vector<2x128xf32>
    %265 = arith.andi %257, %264 : vector<2x128xi1>
    %266 = arith.xori %246, %265 : vector<2x128xi1>
    %c0_110 = arith.constant 0 : index
    %c0_111 = arith.constant 0 : index
    %c14 = arith.constant 14 : index
    %267 = vector.load %arg3[%c0_110, %c0_111, %c14] : memref<1x2x64xf32, #tpu.memory_space<vmem>>, vector<1x2x1xf32>
    %268 = vector.shape_cast %267 : vector<1x2x1xf32> to vector<2x1xf32>
    %269 = vector.broadcast %268 : vector<2x1xf32> to vector<2x128xf32>
    %270 = arith.cmpf ogt, %269, %1 : vector<2x128xf32>
    %c0_112 = arith.constant 0 : index
    %c0_113 = arith.constant 0 : index
    %c29 = arith.constant 29 : index
    %271 = vector.load %arg3[%c0_112, %c0_113, %c29] : memref<1x2x64xf32, #tpu.memory_space<vmem>>, vector<1x2x1xf32>
    %272 = vector.shape_cast %271 : vector<1x2x1xf32> to vector<2x1xf32>
    %c0_114 = arith.constant 0 : index
    %c0_115 = arith.constant 0 : index
    %c45 = arith.constant 45 : index
    %273 = vector.load %arg3[%c0_114, %c0_115, %c45] : memref<1x2x64xf32, #tpu.memory_space<vmem>>, vector<1x2x1xf32>
    %274 = vector.shape_cast %273 : vector<1x2x1xf32> to vector<2x1xf32>
    %c0_116 = arith.constant 0 : index
    %c0_117 = arith.constant 0 : index
    %c61 = arith.constant 61 : index
    %275 = vector.load %arg3[%c0_116, %c0_117, %c61] : memref<1x2x64xf32, #tpu.memory_space<vmem>>, vector<1x2x1xf32>
    %276 = vector.shape_cast %275 : vector<1x2x1xf32> to vector<2x1xf32>
    %277 = arith.xori %250, %270 : vector<2x128xi1>
    %278 = vector.broadcast %272 : vector<2x1xf32> to vector<2x128xf32>
    %279 = arith.mulf %0, %278 : vector<2x128xf32>
    %280 = vector.broadcast %274 : vector<2x1xf32> to vector<2x128xf32>
    %281 = arith.mulf %1, %280 : vector<2x128xf32>
    %282 = arith.subf %279, %281 : vector<2x128xf32>
    %283 = vector.broadcast %276 : vector<2x1xf32> to vector<2x128xf32>
    %284 = arith.cmpf ole, %282, %283 : vector<2x128xf32>
    %285 = arith.andi %277, %284 : vector<2x128xi1>
    %286 = arith.xori %266, %285 : vector<2x128xi1>
    %c0_118 = arith.constant 0 : index
    %c0_119 = arith.constant 0 : index
    %c15 = arith.constant 15 : index
    %287 = vector.load %arg3[%c0_118, %c0_119, %c15] : memref<1x2x64xf32, #tpu.memory_space<vmem>>, vector<1x2x1xf32>
    %288 = vector.shape_cast %287 : vector<1x2x1xf32> to vector<2x1xf32>
    %289 = vector.broadcast %288 : vector<2x1xf32> to vector<2x128xf32>
    %290 = arith.cmpf ogt, %289, %1 : vector<2x128xf32>
    %c0_120 = arith.constant 0 : index
    %c0_121 = arith.constant 0 : index
    %c30 = arith.constant 30 : index
    %291 = vector.load %arg3[%c0_120, %c0_121, %c30] : memref<1x2x64xf32, #tpu.memory_space<vmem>>, vector<1x2x1xf32>
    %292 = vector.shape_cast %291 : vector<1x2x1xf32> to vector<2x1xf32>
    %c0_122 = arith.constant 0 : index
    %c0_123 = arith.constant 0 : index
    %c46 = arith.constant 46 : index
    %293 = vector.load %arg3[%c0_122, %c0_123, %c46] : memref<1x2x64xf32, #tpu.memory_space<vmem>>, vector<1x2x1xf32>
    %294 = vector.shape_cast %293 : vector<1x2x1xf32> to vector<2x1xf32>
    %c0_124 = arith.constant 0 : index
    %c0_125 = arith.constant 0 : index
    %c62 = arith.constant 62 : index
    %295 = vector.load %arg3[%c0_124, %c0_125, %c62] : memref<1x2x64xf32, #tpu.memory_space<vmem>>, vector<1x2x1xf32>
    %296 = vector.shape_cast %295 : vector<1x2x1xf32> to vector<2x1xf32>
    %297 = arith.xori %270, %290 : vector<2x128xi1>
    %298 = vector.broadcast %292 : vector<2x1xf32> to vector<2x128xf32>
    %299 = arith.mulf %0, %298 : vector<2x128xf32>
    %300 = vector.broadcast %294 : vector<2x1xf32> to vector<2x128xf32>
    %301 = arith.mulf %1, %300 : vector<2x128xf32>
    %302 = arith.subf %299, %301 : vector<2x128xf32>
    %303 = vector.broadcast %296 : vector<2x1xf32> to vector<2x128xf32>
    %304 = arith.cmpf ole, %302, %303 : vector<2x128xf32>
    %305 = arith.andi %297, %304 : vector<2x128xi1>
    %306 = arith.xori %286, %305 : vector<2x128xi1>
    %c0_126 = arith.constant 0 : index
    %c0_127 = arith.constant 0 : index
    %c31 = arith.constant 31 : index
    %307 = vector.load %arg3[%c0_126, %c0_127, %c31] : memref<1x2x64xf32, #tpu.memory_space<vmem>>, vector<1x2x1xf32>
    %308 = vector.shape_cast %307 : vector<1x2x1xf32> to vector<2x1xf32>
    %c0_128 = arith.constant 0 : index
    %c0_129 = arith.constant 0 : index
    %c47 = arith.constant 47 : index
    %309 = vector.load %arg3[%c0_128, %c0_129, %c47] : memref<1x2x64xf32, #tpu.memory_space<vmem>>, vector<1x2x1xf32>
    %310 = vector.shape_cast %309 : vector<1x2x1xf32> to vector<2x1xf32>
    %c0_130 = arith.constant 0 : index
    %c0_131 = arith.constant 0 : index
    %c63 = arith.constant 63 : index
    %311 = vector.load %arg3[%c0_130, %c0_131, %c63] : memref<1x2x64xf32, #tpu.memory_space<vmem>>, vector<1x2x1xf32>
    %312 = vector.shape_cast %311 : vector<1x2x1xf32> to vector<2x1xf32>
    %313 = arith.xori %290, %5 : vector<2x128xi1>
    %314 = vector.broadcast %308 : vector<2x1xf32> to vector<2x128xf32>
    %315 = arith.mulf %0, %314 : vector<2x128xf32>
    %316 = vector.broadcast %310 : vector<2x1xf32> to vector<2x128xf32>
    %317 = arith.mulf %1, %316 : vector<2x128xf32>
    %318 = arith.subf %315, %317 : vector<2x128xf32>
    %319 = vector.broadcast %312 : vector<2x1xf32> to vector<2x128xf32>
    %320 = arith.cmpf ole, %318, %319 : vector<2x128xf32>
    %321 = arith.andi %313, %320 : vector<2x128xi1>
    %322 = arith.xori %306, %321 : vector<2x128xi1>
    %c0_132 = arith.constant 0 : index
    %c0_133 = arith.constant 0 : index
    %c0_134 = arith.constant 0 : index
    %323 = vector.load %arg4[%c0_132, %c0_133, %c0_134] : memref<1x2x128xf32, #tpu.memory_space<vmem>>, vector<1x2x128xf32>
    %324 = vector.shape_cast %323 : vector<1x2x128xf32> to vector<2x128xf32>
    %cst = arith.constant 2.550000e+02 : f32
    %325 = vector.broadcast %cst : f32 to vector<2x128xf32>
    %326 = arith.subf %325, %324 : vector<2x128xf32>
    %cst_135 = arith.constant 0.000000e+00 : f32
    %327 = vector.broadcast %cst_135 : f32 to vector<2x128xf32>
    %328 = arith.subf %327, %324 : vector<2x128xf32>
    %329 = arith.select %322, %326, %328 : vector<2x128xi1>, vector<2x128xf32>
    %330 = arith.mulf %329, %329 : vector<2x128xf32>
    %cst_136 = arith.constant dense<0.000000e+00> : vector<128xf32>
    %331 = vector.multi_reduction <add>, %330, %cst_136 [0] : vector<2x128xf32> to vector<128xf32>
    %332 = vector.shape_cast %331 : vector<128xf32> to vector<1x128xf32>
    %c0_137 = arith.constant 0 : index
    %c0_138 = arith.constant 0 : index
    %c0_139 = arith.constant 0 : index
    %333 = vector.load %arg5[%c0_137, %c0_138, %c0_139] : memref<1x1x128xf32, #tpu.memory_space<vmem>>, vector<1x1x128xf32>
    %334 = vector.shape_cast %333 : vector<1x1x128xf32> to vector<1x128xf32>
    %335 = vector.shape_cast %332 : vector<1x128xf32> to vector<1x1x128xf32>
    tpu.vector_store %arg5[%c0_137, %c0_138, %c0_139], %335 {strides = array<i32>} : memref<1x1x128xf32, #tpu.memory_space<vmem>>, vector<1x1x128xf32>,
    return
  }
  func.func @transform_0(%arg0: i32) -> (i32, i32) {
    %c0_i32 = arith.constant 0 : i32
    %c0_i32_0 = arith.constant 0 : i32
    %c0_i32_1 = arith.constant 0 : i32
    return %c0_i32, %c0_i32_0 : i32, i32
  }
  func.func @transform_1(%arg0: i32) -> (i32, i32) {
    %c0_i32 = arith.constant 0 : i32
    %c0_i32_0 = arith.constant 0 : i32
    %c0_i32_1 = arith.constant 0 : i32
    return %c0_i32, %c0_i32_0 : i32, i32
  }
  func.func @transform_2(%arg0: i32) -> (i32, i32, i32) {
    %c0_i32 = arith.constant 0 : i32
    %c0_i32_0 = arith.constant 0 : i32
    %c0_i32_1 = arith.constant 0 : i32
    return %arg0, %c0_i32, %c0_i32_0 : i32, i32, i32
  }
  func.func @transform_3(%arg0: i32) -> (i32, i32, i32) {
    %c0_i32 = arith.constant 0 : i32
    %c0_i32_0 = arith.constant 0 : i32
    %c0_i32_1 = arith.constant 0 : i32
    return %arg0, %c0_i32, %c0_i32_0 : i32, i32, i32
  }
  func.func @transform_4(%arg0: i32) -> (i32, i32, i32) {
    %c0_i32 = arith.constant 0 : i32
    %c0_i32_0 = arith.constant 0 : i32
    %c0_i32_1 = arith.constant 0 : i32
    return %arg0, %c0_i32, %c0_i32_0 : i32, i32, i32
  }
}

</mosaic_0001>

<llo_original>
// kernel: area_poly_loss.1
$region0: #{area_poly_loss.1}
  #allocation0 [shape = 'u32[]', space=smem, size = 0x4, offset = 0x4, fixed_abs, tag = 'smem constant byte address 0x4 - core index']
  #allocation1 [shape = 'u32[72,128]{1,0:T(1,128)}', space=vmem, size = 0x9000, scoped, tag = 'internal scratch']
  %s0 = inlined_call_operand.vmem [shape: f32[2,128], index: 0, kind: input, shape index: {}]
  %s1 = inlined_call_operand.vmem [shape: f32[2,128], index: 1, kind: input, shape index: {}]
  %s2 = inlined_call_operand.vmem [shape: f32[2,2,64], index: 2, kind: input, shape index: {}]
  %s3 = inlined_call_operand.vmem [shape: f32[2,2,128], index: 3, kind: input, shape index: {}]
  %s4 = inlined_call_operand.vmem [shape: f32[2,1,128], index: 4, kind: output, shape index: {}]
  %s5 = sld [smem:[#allocation0]]
  $region49: #{area_poly_loss.1} parent=0
    _
  %s7 = ssub.s32 1, %s5
  %s8 = scalar_select 0, %s7, %s5
  loop: start=0, step=1, limit=4
  $region2: #{area_poly_loss.1} parent=0 // loop_pre_header
    _
  $region3: #{area_poly_loss.1} parent=0 // loop_header
    %s10 = sphi 0, %s14
    %p11 = scmp.ge.s32.totalorder %s10, 4
    %s18 = sphi 0, %s18
    %s20 = sphi 0, %s18
    %s21 = sphi 0, %s20
    %s35 = sphi 0, %s21
    %s39 = sphi 0, %s39
    %s41 = sphi 0, %s39
    %s42 = sphi 0, %s41
    %s56 = sphi 0, %s42
    %s62 = sphi 0, %s64
    %s65 = sphi 0, %s62
    %s66 = sphi 0, %s65
    %s82 = sphi 0, %s66
    %s88 = sphi 0, %s90
    %s91 = sphi 0, %s88
    %s92 = sphi 0, %s91
    %s108 = sphi 0, %s92
    %s114 = sphi 0, %s116
    %s117 = sphi 0, %s114
    %s118 = sphi 0, %s117
    %s134 = sphi 0, %s118
  $region4: #{area_poly_loss.1} parent=0 // loop_header_branch
    %13 = sbr.rel (%p11) target = $region8
  $region5: #{area_poly_loss.1} parent=0 // loop_body
    %s15 = ssub.s32 %s10, 1
    %s16 = ssub.s32 %s10, 2
    %s17 = sadd.s32 %s10, 1
    %s19 = sadd.s32 %s18, 1
    %p22 = scmp.eq.s32.totalorder %s10, 1
    %p23 = scmp.ne.s32.totalorder %s18, %s20
    %p24 = scmp.eq.s32.totalorder %s10, 0
    %p25 = por %p23, %p24
    %p26 = scmp.ne.s32.totalorder %s18, %s20
    %p27 = scmp.eq.s32.totalorder %s15, 1
    %p28 = por %p26, %p27
    %p29 = scmp.ne.s32.totalorder %s20, %s21
    %p30 = scmp.eq.s32.totalorder %s15, 0
    %p31 = por %p29, %p30
    %p32 = scmp.ne.s32.totalorder %s20, %s21
    %p33 = scmp.eq.s32.totalorder %s16, 1
    %p34 = por %p32, %p33
    %p36 = scmp.ne.s32.totalorder %s21, %s35
    %p37 = scmp.eq.s32.totalorder %s16, 0
    %p38 = por %p36, %p37
    %s40 = sadd.s32 %s39, 1
    %p43 = scmp.eq.s32.totalorder %s10, 1
    %p44 = scmp.ne.s32.totalorder %s39, %s41
    %p45 = scmp.eq.s32.totalorder %s10, 0
    %p46 = por %p44, %p45
    %p47 = scmp.ne.s32.totalorder %s39, %s41
    %p48 = scmp.eq.s32.totalorder %s15, 1
    %p49 = por %p47, %p48
    %p50 = scmp.ne.s32.totalorder %s41, %s42
    %p51 = scmp.eq.s32.totalorder %s15, 0
    %p52 = por %p50, %p51
    %p53 = scmp.ne.s32.totalorder %s41, %s42
    %p54 = scmp.eq.s32.totalorder %s16, 1
    %p55 = por %p53, %p54
    %p57 = scmp.ne.s32.totalorder %s42, %s56
    %p58 = scmp.eq.s32.totalorder %s16, 0
    %p59 = por %p57, %p58
    %s60 = ssub.s32 %s10, %s17
    %p61 = scmp.eq.s32.totalorder %s60, 0
    %s63 = sadd.s32 %s62, 1
    %s64 = scalar_select %p61, %s62, %s63
    %p67 = pneg %p61
    %p68 = scmp.eq.s32.totalorder %s10, 1
    %p69 = por %p67, %p68
    %p70 = scmp.ne.s32.totalorder %s62, %s65
    %p71 = scmp.eq.s32.totalorder %s10, 0
    %p72 = por %p70, %p71
    %p73 = scmp.ne.s32.totalorder %s62, %s65
    %p74 = scmp.eq.s32.totalorder %s15, 1
    %p75 = por %p73, %p74
    %p76 = scmp.ne.s32.totalorder %s65, %s66
    %p77 = scmp.eq.s32.totalorder %s15, 0
    %p78 = por %p76, %p77
    %p79 = scmp.ne.s32.totalorder %s65, %s66
    %p80 = scmp.eq.s32.totalorder %s16, 1
    %p81 = por %p79, %p80
    %p83 = scmp.ne.s32.totalorder %s66, %s82
    %p84 = scmp.eq.s32.totalorder %s16, 0
    %p85 = por %p83, %p84
    %s86 = ssub.s32 %s10, %s17
    %p87 = scmp.eq.s32.totalorder %s86, 0
    %s89 = sadd.s32 %s88, 1
    %s90 = scalar_select %p87, %s88, %s89
    %p93 = pneg %p87
    %p94 = scmp.eq.s32.totalorder %s10, 1
    %p95 = por %p93, %p94
    %p96 = scmp.ne.s32.totalorder %s88, %s91
    %p97 = scmp.eq.s32.totalorder %s10, 0
    %p98 = por %p96, %p97
    %p99 = scmp.ne.s32.totalorder %s88, %s91
    %p100 = scmp.eq.s32.totalorder %s15, 1
    %p101 = por %p99, %p100
    %p102 = scmp.ne.s32.totalorder %s91, %s92
    %p103 = scmp.eq.s32.totalorder %s15, 0
    %p104 = por %p102, %p103
    %p105 = scmp.ne.s32.totalorder %s91, %s92
    %p106 = scmp.eq.s32.totalorder %s16, 1
    %p107 = por %p105, %p106
    %p109 = scmp.ne.s32.totalorder %s92, %s108
    %p110 = scmp.eq.s32.totalorder %s16, 0
    %p111 = por %p109, %p110
    %s112 = ssub.s32 %s10, %s17
    %p113 = scmp.eq.s32.totalorder %s112, 0
    %s115 = sadd.s32 %s114, 1
    %s116 = scalar_select %p113, %s114, %s115
    %p119 = pneg %p113
    %p120 = scmp.eq.s32.totalorder %s10, 1
    %p121 = por %p119, %p120
    %p122 = scmp.ne.s32.totalorder %s114, %s117
    %p123 = scmp.eq.s32.totalorder %s10, 0
    %p124 = por %p122, %p123
    %p125 = scmp.ne.s32.totalorder %s114, %s117
    %p126 = scmp.eq.s32.totalorder %s15, 1
    %p127 = por %p125, %p126
    %p128 = scmp.ne.s32.totalorder %s117, %s118
    %p129 = scmp.eq.s32.totalorder %s15, 0
    %p130 = por %p128, %p129
    %p131 = scmp.ne.s32.totalorder %s117, %s118
    %p132 = scmp.eq.s32.totalorder %s16, 1
    %p133 = por %p131, %p132
    %p135 = scmp.ne.s32.totalorder %s118, %s134
    %p136 = scmp.eq.s32.totalorder %s16, 0
    %p137 = por %p135, %p136
    %p138 = scmp.le.s32.totalorder 1, %s10
    %p139 = scmp.lt.s32.totalorder %s10, 3
    %p140 = pnand %p138, %p139
    %p141 = pneg %p140
    // Predicated region
    $region9: #{area_poly_loss.1} parent=5 // pred_check
      _
    $region10: #{area_poly_loss.1} parent=5 // pred_check_branch
      %143 = sbr.rel (%p140) target = $region12
    $region11: #{area_poly_loss.1} parent=5 // pred_region
      %s144 = ssub.s32 %s10, 1
      // Predicated region
      $region13: #{area_poly_loss.1} parent=11 // pred_check
        %p145 = pneg %p31
      $region14: #{area_poly_loss.1} parent=11 // pred_check_branch
        %147 = sbr.rel (%p145) target = $region16
      $region15: #{area_poly_loss.1} parent=11 // pred_region
        _
      $region16: #{area_poly_loss.1} parent=11 // pred_fallthru
        _
      // Predicated region
      $region17: #{area_poly_loss.1} parent=11 // pred_check
        %p148 = pneg %p52
      $region18: #{area_poly_loss.1} parent=11 // pred_check_branch
        %150 = sbr.rel (%p148) target = $region20
      $region19: #{area_poly_loss.1} parent=11 // pred_region
        _
      $region20: #{area_poly_loss.1} parent=11 // pred_fallthru
        _
    $region12: #{area_poly_loss.1} parent=5 // pred_fallthru
      _
    %p151 = scmp.lt.s32.totalorder %s10, 2
    // Predicated region
    $region21: #{area_poly_loss.1} parent=5 // pred_check
      %p152 = pneg %p151
    $region22: #{area_poly_loss.1} parent=5 // pred_check_branch
      %154 = sbr.rel (%p152) target = $region24
    $region23: #{area_poly_loss.1} parent=5 // pred_region
      // Predicated region
      $region25: #{area_poly_loss.1} parent=23 // pred_check
        %p155 = pneg %p72
      $region26: #{area_poly_loss.1} parent=23 // pred_check_branch
        %157 = sbr.rel (%p155) target = $region28
      $region27: #{area_poly_loss.1} parent=23 // pred_region
        %p158 = scmp.lt.s32.totalorder %s10, 1
        %s159 = scalar_select %p158, %s10, 1
        %s160 = smul.addr %s159, 2
        %s161 = scalar_lea.vmem %s2, %s160
      $region28: #{area_poly_loss.1} parent=23 // pred_fallthru
        _
      // Predicated region
      $region29: #{area_poly_loss.1} parent=23 // pred_check
        %p162 = pneg %p98
      $region30: #{area_poly_loss.1} parent=23 // pred_check_branch
        %164 = sbr.rel (%p162) target = $region32
      $region31: #{area_poly_loss.1} parent=23 // pred_region
        %p165 = scmp.lt.s32.totalorder %s10, 1
        %s166 = scalar_select %p165, %s10, 1
        %s167 = smul.addr %s166, 2
        %s168 = scalar_lea.vmem %s3, %s167
      $region32: #{area_poly_loss.1} parent=23 // pred_fallthru
        _
    $region24: #{area_poly_loss.1} parent=5 // pred_fallthru
      _
    %p169 = scmp.le.s32.totalorder 1, %s10
    %p170 = scmp.lt.s32.totalorder %s10, 3
    %p171 = pnand %p169, %p170
    %p172 = pneg %p171
    // Predicated region
    $region33: #{area_poly_loss.1} parent=5 // pred_check
      _
    $region34: #{area_poly_loss.1} parent=5 // pred_check_branch
      %174 = sbr.rel (%p171) target = $region36
    $region35: #{area_poly_loss.1} parent=5 // pred_region
      %s175 = ssub.s32 %s10, 1
      %p176 = pneg %p31
      %p177 = pneg %p28
      %p178 = pneg %p52
      %p179 = pneg %p49
      %p180 = scmp.lt.s32.totalorder %s15, 1
      %s181 = scalar_select %p180, %s15, 1
      %s182 = smul.addr %s181, 2
      %s183 = scalar_lea.vmem %s2, %s182
      %p184 = pneg %p78
      %p185 = pneg %p75
      %p186 = scmp.lt.s32.totalorder %s15, 1
      %s187 = scalar_select %p186, %s15, 1
      %s188 = smul.addr %s187, 2
      %s189 = scalar_lea.vmem %s3, %s188
      %p190 = pneg %p104
      %p191 = pneg %p101
      %p192 = pneg %p130
      %p193 = pneg %p127
      %p194 = scmp.lt.s32.totalorder %s15, 1
      %s195 = scalar_select %p194, %s15, 1
      %s196 = scalar_lea.vmem %s4, %s195
      %p197 = scmp.lt.s32.totalorder %s15, 1
      %s198 = scalar_select %p197, %s15, 1
      %s199 = smul.addr %s198, 2
      %s200 = scalar_lea.vmem %s2, %s199
      %p201 = scmp.lt.s32.totalorder %s15, 1
      %s202 = scalar_select %p201, %s15, 1
      %s203 = smul.addr %s202, 2
      %s204 = scalar_lea.vmem %s3, %s203
      %p205 = scmp.lt.s32.totalorder %s15, 1
      %s206 = scalar_select %p205, %s15, 1
      %s207 = scalar_lea.vmem %s4, %s206
      %v208 = vld [vmem:[%s0] sm:$0x3]
      %v209 = vld [vmem:[%s1] sm:$0x3]
      %v210 = vld [vmem:[%s200] sm:$0x3]
      %212 = vset.pattern.permute.xlu0 0
      %213 = vperm.xlu0 %212, %v210
      %v214 = vpop.permute.xlu0 %213
      %vm216 = vcmp.gt.f32.partialorder %v214, %v209
      %217 = vset.pattern.permute.xlu0 1
      %218 = vperm.xlu0 %217, %v210
      %v219 = vpop.permute.xlu0 %218
      %vm221 = vcmp.gt.f32.partialorder %v219, %v209
      %vm222 = vmxor %vm216, %vm221
      %223 = vset.pattern.permute.xlu0 16
      %224 = vperm.xlu0 %223, %v210
      %v225 = vpop.permute.xlu0 %224
      %v227 = vmul.f32 %v208, %v225
      %228 = vset.pattern.permute.xlu0 32
      %229 = vperm.xlu0 %228, %v210
      %v230 = vpop.permute.xlu0 %229
      %v232 = vmul.f32 %v209, %v230
      %v233 = vsub.f32 %v227, %v232
      %234 = vset.pattern.permute.xlu0 48
      %235 = vperm.xlu0 %234, %v210
      %v236 = vpop.permute.xlu0 %235
      %vm238 = vcmp.le.f32.partialorder %v233, %v236
      %vm239 = vmand %vm222, %vm238
      %240 = vset.pattern.permute.xlu0 2
      %241 = vperm.xlu0 %240, %v210
      %v242 = vpop.permute.xlu0 %241
      %vm244 = vcmp.gt.f32.partialorder %v242, %v209
      %vm245 = vmxor %vm221, %vm244
      %246 = vset.pattern.permute.xlu0 17
      %247 = vperm.xlu0 %246, %v210
      %v248 = vpop.permute.xlu0 %247
      %v250 = vmul.f32 %v208, %v248
      %251 = vset.pattern.permute.xlu0 33
      %252 = vperm.xlu0 %251, %v210
      %v253 = vpop.permute.xlu0 %252
      %v255 = vmul.f32 %v209, %v253
      %v256 = vsub.f32 %v250, %v255
      %257 = vset.pattern.permute.xlu0 49
      %258 = vperm.xlu0 %257, %v210
      %v259 = vpop.permute.xlu0 %258
      %vm261 = vcmp.le.f32.partialorder %v256, %v259
      %vm262 = vmand %vm245, %vm261
      %vm263 = vmxor %vm239, %vm262
      %264 = vset.pattern.permute.xlu0 3
      %265 = vperm.xlu0 %264, %v210
      %v266 = vpop.permute.xlu0 %265
      %vm268 = vcmp.gt.f32.partialorder %v266, %v209
      %vm269 = vmxor %vm244, %vm268
      %270 = vset.pattern.permute.xlu0 18
      %271 = vperm.xlu0 %270, %v210
      %v272 = vpop.permute.xlu0 %271
      %v274 = vmul.f32 %v208, %v272
      %275 = vset.pattern.permute.xlu0 34
      %276 = vperm.xlu0 %275, %v210
      %v277 = vpop.permute.xlu0 %276
      %v279 = vmul.f32 %v209, %v277
      %v280 = vsub.f32 %v274, %v279
      %281 = vset.pattern.permute.xlu0 50
      %282 = vperm.xlu0 %281, %v210
      %v283 = vpop.permute.xlu0 %282
      %vm285 = vcmp.le.f32.partialorder %v280, %v283
      %vm286 = vmand %vm269, %vm285
      %vm287 = vmxor %vm263, %vm286
      %288 = vset.pattern.permute.xlu0 4
      %289 = vperm.xlu0 %288, %v210
      %v290 = vpop.permute.xlu0 %289
      %vm292 = vcmp.gt.f32.partialorder %v290, %v209
      %vm293 = vmxor %vm268, %vm292
      %294 = vset.pattern.permute.xlu0 19
      %295 = vperm.xlu0 %294, %v210
      %v296 = vpop.permute.xlu0 %295
      %v298 = vmul.f32 %v208, %v296
      %299 = vset.pattern.permute.xlu0 35
      %300 = vperm.xlu0 %299, %v210
      %v301 = vpop.permute.xlu0 %300
      %v303 = vmul.f32 %v209, %v301
      %v304 = vsub.f32 %v298, %v303
      %305 = vset.pattern.permute.xlu0 51
      %306 = vperm.xlu0 %305, %v210
      %v307 = vpop.permute.xlu0 %306
      %vm309 = vcmp.le.f32.partialorder %v304, %v307
      %vm310 = vmand %vm293, %vm309
      %vm311 = vmxor %vm287, %vm310
      %312 = vset.pattern.permute.xlu0 5
      %313 = vperm.xlu0 %312, %v210
      %v314 = vpop.permute.xlu0 %313
      %vm316 = vcmp.gt.f32.partialorder %v314, %v209
      %vm317 = vmxor %vm292, %vm316
      %318 = vset.pattern.permute.xlu0 20
      %319 = vperm.xlu0 %318, %v210
      %v320 = vpop.permute.xlu0 %319
      %v322 = vmul.f32 %v208, %v320
      %323 = vset.pattern.permute.xlu0 36
      %324 = vperm.xlu0 %323, %v210
      %v325 = vpop.permute.xlu0 %324
      %v327 = vmul.f32 %v209, %v325
      %v328 = vsub.f32 %v322, %v327
      %329 = vset.pattern.permute.xlu0 52
      %330 = vperm.xlu0 %329, %v210
      %v331 = vpop.permute.xlu0 %330
      %vm333 = vcmp.le.f32.partialorder %v328, %v331
      %vm334 = vmand %vm317, %vm333
      %vm335 = vmxor %vm311, %vm334
      %336 = vset.pattern.permute.xlu0 6
      %337 = vperm.xlu0 %336, %v210
      %v338 = vpop.permute.xlu0 %337
      %vm340 = vcmp.gt.f32.partialorder %v338, %v209
      %vm341 = vmxor %vm316, %vm340
      %342 = vset.pattern.permute.xlu0 21
      %343 = vperm.xlu0 %342, %v210
      %v344 = vpop.permute.xlu0 %343
      %v346 = vmul.f32 %v208, %v344
      %347 = vset.pattern.permute.xlu0 37
      %348 = vperm.xlu0 %347, %v210
      %v349 = vpop.permute.xlu0 %348
      %v351 = vmul.f32 %v209, %v349
      %v352 = vsub.f32 %v346, %v351
      %353 = vset.pattern.permute.xlu0 53
      %354 = vperm.xlu0 %353, %v210
      %v355 = vpop.permute.xlu0 %354
      %vm357 = vcmp.le.f32.partialorder %v352, %v355
      %vm358 = vmand %vm341, %vm357
      %vm359 = vmxor %vm335, %vm358
      %360 = vset.pattern.permute.xlu0 7
      %361 = vperm.xlu0 %360, %v210
      %v362 = vpop.permute.xlu0 %361
      %vm364 = vcmp.gt.f32.partialorder %v362, %v209
      %vm365 = vmxor %vm340, %vm364
      %366 = vset.pattern.permute.xlu0 22
      %367 = vperm.xlu0 %366, %v210
      %v368 = vpop.permute.xlu0 %367
      %v370 = vmul.f32 %v208, %v368
      %371 = vset.pattern.permute.xlu0 38
      %372 = vperm.xlu0 %371, %v210
      %v373 = vpop.permute.xlu0 %372
      %v375 = vmul.f32 %v209, %v373
      %v376 = vsub.f32 %v370, %v375
      %377 = vset.pattern.permute.xlu0 54
      %378 = vperm.xlu0 %377, %v210
      %v379 = vpop.permute.xlu0 %378
      %vm381 = vcmp.le.f32.partialorder %v376, %v379
      %vm382 = vmand %vm365, %vm381
      %vm383 = vmxor %vm359, %vm382
      %384 = vset.pattern.permute.xlu0 8
      %385 = vperm.xlu0 %384, %v210
      %v386 = vpop.permute.xlu0 %385
      %vm388 = vcmp.gt.f32.partialorder %v386, %v209
      %vm389 = vmxor %vm364, %vm388
      %390 = vset.pattern.permute.xlu0 23
      %391 = vperm.xlu0 %390, %v210
      %v392 = vpop.permute.xlu0 %391
      %v394 = vmul.f32 %v208, %v392
      %395 = vset.pattern.permute.xlu0 39
      %396 = vperm.xlu0 %395, %v210
      %v397 = vpop.permute.xlu0 %396
      %v399 = vmul.f32 %v209, %v397
      %v400 = vsub.f32 %v394, %v399
      %401 = vset.pattern.permute.xlu0 55
      %402 = vperm.xlu0 %401, %v210
      %v403 = vpop.permute.xlu0 %402
      %vm405 = vcmp.le.f32.partialorder %v400, %v403
      %vm406 = vmand %vm389, %vm405
      %vm407 = vmxor %vm383, %vm406
      %408 = vset.pattern.permute.xlu0 9
      %409 = vperm.xlu0 %408, %v210
      %v410 = vpop.permute.xlu0 %409
      %vm412 = vcmp.gt.f32.partialorder %v410, %v209
      %vm413 = vmxor %vm388, %vm412
      %414 = vset.pattern.permute.xlu0 24
      %415 = vperm.xlu0 %414, %v210
      %v416 = vpop.permute.xlu0 %415
      %v418 = vmul.f32 %v208, %v416
      %419 = vset.pattern.permute.xlu0 40
      %420 = vperm.xlu0 %419, %v210
      %v421 = vpop.permute.xlu0 %420
      %v423 = vmul.f32 %v209, %v421
      %v424 = vsub.f32 %v418, %v423
      %425 = vset.pattern.permute.xlu0 56
      %426 = vperm.xlu0 %425, %v210
      %v427 = vpop.permute.xlu0 %426
      %vm429 = vcmp.le.f32.partialorder %v424, %v427
      %vm430 = vmand %vm413, %vm429
      %vm431 = vmxor %vm407, %vm430
      %432 = vset.pattern.permute.xlu0 10
      %433 = vperm.xlu0 %432, %v210
      %v434 = vpop.permute.xlu0 %433
      %vm436 = vcmp.gt.f32.partialorder %v434, %v209
      %vm437 = vmxor %vm412, %vm436
      %438 = vset.pattern.permute.xlu0 25
      %439 = vperm.xlu0 %438, %v210
      %v440 = vpop.permute.xlu0 %439
      %v442 = vmul.f32 %v208, %v440
      %443 = vset.pattern.permute.xlu0 41
      %444 = vperm.xlu0 %443, %v210
      %v445 = vpop.permute.xlu0 %444
      %v447 = vmul.f32 %v209, %v445
      %v448 = vsub.f32 %v442, %v447
      %449 = vset.pattern.permute.xlu0 57
      %450 = vperm.xlu0 %449, %v210
      %v451 = vpop.permute.xlu0 %450
      %vm453 = vcmp.le.f32.partialorder %v448, %v451
      %vm454 = vmand %vm437, %vm453
      %vm455 = vmxor %vm431, %vm454
      %456 = vset.pattern.permute.xlu0 11
      %457 = vperm.xlu0 %456, %v210
      %v458 = vpop.permute.xlu0 %457
      %vm460 = vcmp.gt.f32.partialorder %v458, %v209
      %vm461 = vmxor %vm436, %vm460
      %462 = vset.pattern.permute.xlu0 26
      %463 = vperm.xlu0 %462, %v210
      %v464 = vpop.permute.xlu0 %463
      %v466 = vmul.f32 %v208, %v464
      %467 = vset.pattern.permute.xlu0 42
      %468 = vperm.xlu0 %467, %v210
      %v469 = vpop.permute.xlu0 %468
      %v471 = vmul.f32 %v209, %v469
      %v472 = vsub.f32 %v466, %v471
      %473 = vset.pattern.permute.xlu0 58
      %474 = vperm.xlu0 %473, %v210
      %v475 = vpop.permute.xlu0 %474
      %vm477 = vcmp.le.f32.partialorder %v472, %v475
      %vm478 = vmand %vm461, %vm477
      %vm479 = vmxor %vm455, %vm478
      %480 = vset.pattern.permute.xlu0 12
      %481 = vperm.xlu0 %480, %v210
      %v482 = vpop.permute.xlu0 %481
      %vm484 = vcmp.gt.f32.partialorder %v482, %v209
      %vm485 = vmxor %vm460, %vm484
      %486 = vset.pattern.permute.xlu0 27
      %487 = vperm.xlu0 %486, %v210
      %v488 = vpop.permute.xlu0 %487
      %v490 = vmul.f32 %v208, %v488
      %491 = vset.pattern.permute.xlu0 43
      %492 = vperm.xlu0 %491, %v210
      %v493 = vpop.permute.xlu0 %492
      %v495 = vmul.f32 %v209, %v493
      %v496 = vsub.f32 %v490, %v495
      %497 = vset.pattern.permute.xlu0 59
      %498 = vperm.xlu0 %497, %v210
      %v499 = vpop.permute.xlu0 %498
      %vm501 = vcmp.le.f32.partialorder %v496, %v499
      %vm502 = vmand %vm485, %vm501
      %vm503 = vmxor %vm479, %vm502
      %504 = vset.pattern.permute.xlu0 13
      %505 = vperm.xlu0 %504, %v210
      %v506 = vpop.permute.xlu0 %505
      %vm508 = vcmp.gt.f32.partialorder %v506, %v209
      %vm509 = vmxor %vm484, %vm508
      %510 = vset.pattern.permute.xlu0 28
      %511 = vperm.xlu0 %510, %v210
      %v512 = vpop.permute.xlu0 %511
      %v514 = vmul.f32 %v208, %v512
      %515 = vset.pattern.permute.xlu0 44
      %516 = vperm.xlu0 %515, %v210
      %v517 = vpop.permute.xlu0 %516
      %v519 = vmul.f32 %v209, %v517
      %v520 = vsub.f32 %v514, %v519
      %521 = vset.pattern.permute.xlu0 60
      %522 = vperm.xlu0 %521, %v210
      %v523 = vpop.permute.xlu0 %522
      %vm525 = vcmp.le.f32.partialorder %v520, %v523
      %vm526 = vmand %vm509, %vm525
      %vm527 = vmxor %vm503, %vm526
      %528 = vset.pattern.permute.xlu0 14
      %529 = vperm.xlu0 %528, %v210
      %v530 = vpop.permute.xlu0 %529
      %vm532 = vcmp.gt.f32.partialorder %v530, %v209
      %vm533 = vmxor %vm508, %vm532
      %534 = vset.pattern.permute.xlu0 29
      %535 = vperm.xlu0 %534, %v210
      %v536 = vpop.permute.xlu0 %535
      %v538 = vmul.f32 %v208, %v536
      %539 = vset.pattern.permute.xlu0 45
      %540 = vperm.xlu0 %539, %v210
      %v541 = vpop.permute.xlu0 %540
      %v543 = vmul.f32 %v209, %v541
      %v544 = vsub.f32 %v538, %v543
      %545 = vset.pattern.permute.xlu0 61
      %546 = vperm.xlu0 %545, %v210
      %v547 = vpop.permute.xlu0 %546
      %vm549 = vcmp.le.f32.partialorder %v544, %v547
      %vm550 = vmand %vm533, %vm549
      %vm551 = vmxor %vm527, %vm550
      %552 = vset.pattern.permute.xlu0 15
      %553 = vperm.xlu0 %552, %v210
      %v554 = vpop.permute.xlu0 %553
      %vm556 = vcmp.gt.f32.partialorder %v554, %v209
      %vm557 = vmxor %vm532, %vm556
      %558 = vset.pattern.permute.xlu0 30
      %559 = vperm.xlu0 %558, %v210
      %v560 = vpop.permute.xlu0 %559
      %v562 = vmul.f32 %v208, %v560
      %563 = vset.pattern.permute.xlu0 46
      %564 = vperm.xlu0 %563, %v210
      %v565 = vpop.permute.xlu0 %564
      %v567 = vmul.f32 %v209, %v565
      %v568 = vsub.f32 %v562, %v567
      %569 = vset.pattern.permute.xlu0 62
      %570 = vperm.xlu0 %569, %v210
      %v571 = vpop.permute.xlu0 %570
      %vm573 = vcmp.le.f32.partialorder %v568, %v571
      %vm574 = vmand %vm557, %vm573
      %vm575 = vmxor %vm551, %vm574
      %vm576 = vmxor %vm556, %vm216
      %577 = vset.pattern.permute.xlu0 31
      %578 = vperm.xlu0 %577, %v210
      %v579 = vpop.permute.xlu0 %578
      %v581 = vmul.f32 %v208, %v579
      %582 = vset.pattern.permute.xlu0 47
      %583 = vperm.xlu0 %582, %v210
      %v584 = vpop.permute.xlu0 %583
      %v586 = vmul.f32 %v209, %v584
      %v587 = vsub.f32 %v581, %v586
      %588 = vset.pattern.permute.xlu0 63
      %589 = vperm.xlu0 %588, %v210
      %v590 = vpop.permute.xlu0 %589
      %vm592 = vcmp.le.f32.partialorder %v587, %v590
      %vm593 = vmand %vm576, %vm592
      %vm594 = vmxor %vm575, %vm593
      %v595 = vld [vmem:[%s204] sm:$0x3]
      %v596 = vsub.f32 255.0, %v595
      %v597 = vsub.f32 0.0, %v595
      %v598 = vsel %vm594, %v596, %v597
      %v599 = vmul.f32 %v598, %v598
      %vm600 = vcmask 1041408
      %v601 = vsel %vm600, %v599, 0.0
      %v602 = vrot.slane %v601, 4
      %v603 = vadd.f32 %v601, %v602
      %v604 = vrot.slane %v603, 2
      %v605 = vadd.f32 %v603, %v604
      %v606 = vrot.slane %v605, 1
      %v607 = vadd.f32 %v605, %v606
      %608 = vst [vmem:[%s207] sm:$0x1] %v607
      %p609 = scmp.lt.s32.totalorder %s15, 1
      %s610 = scalar_select %p609, %s15, 1
      %s611 = scalar_lea.vmem %s4, %s610
      // Predicated region
      $region37: #{area_poly_loss.1} parent=35 // pred_check
        %p612 = pneg %p127
      $region38: #{area_poly_loss.1} parent=35 // pred_check_branch
        %614 = sbr.rel (%p612) target = $region40
      $region39: #{area_poly_loss.1} parent=35 // pred_region
        _
      $region40: #{area_poly_loss.1} parent=35 // pred_fallthru
        _
    $region36: #{area_poly_loss.1} parent=5 // pred_fallthru
      _
    %p615 = scmp.le.s32.totalorder 2, %s10
    // Predicated region
    $region41: #{area_poly_loss.1} parent=5 // pred_check
      %p616 = pneg %p615
    $region42: #{area_poly_loss.1} parent=5 // pred_check_branch
      %618 = sbr.rel (%p616) target = $region44
    $region43: #{area_poly_loss.1} parent=5 // pred_region
      %s619 = ssub.s32 %s10, 2
      // Predicated region
      $region45: #{area_poly_loss.1} parent=43 // pred_check
        %p620 = pneg %p133
      $region46: #{area_poly_loss.1} parent=43 // pred_check_branch
        %622 = sbr.rel (%p620) target = $region48
      $region47: #{area_poly_loss.1} parent=43 // pred_region
        %p623 = scmp.lt.s32.totalorder %s16, 1
        %s624 = scalar_select %p623, %s16, 1
        %s625 = scalar_lea.vmem %s4, %s624
      $region48: #{area_poly_loss.1} parent=43 // pred_fallthru
        _
    $region44: #{area_poly_loss.1} parent=5 // pred_fallthru
      _
  $region6: #{area_poly_loss.1} parent=0 // loop_footer
    %s14 = sadd.s32 1, %s10
  $region7: #{area_poly_loss.1} parent=0 // loop_footer_branch
    %9 = sbr.rel target = $region3
  $region8: #{area_poly_loss.1} parent=0 // loop_exit
    _

</llo_original>
